<compile_context>
chip_gen: v7x
topology: tpu7x:2x2x1
jax: 0.10.0
libtpu: 0.0.40
codegen_flags: <defaults>
</compile_context>

<pallas_src>
import functools

import jax
import jax.numpy as jnp
from jax.experimental import pallas as pl
from jax.experimental.pallas import tpu as pltpu


def clf_kernel(x_ref, w1_ref, b1_ref, w2_ref, b2_ref, o_ref):
    # x_ref: (1, 64, TT) in the module's native NCL layout. ReLU is elementwise,
    # so applying it before the (implicit) transpose matches PyTorch exactly.
    x = jnp.maximum(x_ref[0], 0.0)                                     # (64, TT)
    # Linear(64 -> 128), transposed orientation: (128, 64) @ (64, TT).
    h = jnp.dot(w1_ref[...], x, preferred_element_type=jnp.float32)   # (128, TT)
    h = jnp.maximum(h + b1_ref[...], 0.0)                             # +bias, ReLU
    # Linear(128 -> 1), transposed orientation: (1, 128) @ (128, TT).
    o = jnp.dot(w2_ref[...], h, preferred_element_type=jnp.float32)   # (1, TT)
    o_ref[0] = (o + b2_ref[0]).astype(o_ref.dtype)                    # b2: SMEM scalar


def _pick_time_tile(T, tile_t):
    """Lane-aligned time tile: (a) fits comfortably in VMEM, (b) never exceeds
    T when more than one tile is needed, (c) tile sizes are balanced so the
    ragged final tile wastes little compute."""
    tile_t = max(128, (tile_t // 128) * 128)
    t_aligned = 128 * ((T + 127) // 128)
    if t_aligned <= tile_t:
        return T, 1                            # whole T in one block (== full dim)
    n_t = -(-t_aligned // tile_t)              # ceil
    tt = 128 * (-(-t_aligned // (128 * n_t)))  # balanced, multiple of 128, <= tile_t
    return tt, -(-T // tt)


@functools.partial(jax.jit, static_argnames=("tile_t",))
def clf_net_forward(x, w1, b1, w2, b2, *, tile_t=2048):
    """x: (B, 64, T) f32; weights in PyTorch (out, in) layout. Returns (B, T, 1)."""
    B, C, T = x.shape
    assert C == 64, "linear1 expects 64 input features"

    TT, n_t = _pick_time_tile(T, tile_t)

    b1_col = b1.reshape(128, 1)   # broadcasts along the lane (T) axis in-kernel
    b2_s = b2.reshape(1)          # true scalar -> SMEM

    flops = 2 * B * n_t * TT * 64 * 128 + 2 * B * n_t * TT * 128
    bytes_accessed = (x.size + B * T) * 4 + (w1.size + w2.size + b1.size + b2.size) * 4

    out = pl.pallas_call(
        clf_kernel,
        out_shape=jax.ShapeDtypeStruct((B, 1, T), jnp.float32),
        grid_spec=pltpu.PrefetchScalarGridSpec(
            num_scalar_prefetch=0,
            grid=(B, n_t),
            in_specs=[
                pl.BlockSpec((1, 64, TT), lambda b, t: (b, 0, t)),   # x tile (streamed)
                pl.BlockSpec((128, 64), lambda b, t: (0, 0)),        # W1 (VMEM resident)
                pl.BlockSpec((128, 1), lambda b, t: (0, 0)),         # b1 (VMEM resident)
                pl.BlockSpec((1, 128), lambda b, t: (0, 0)),         # W2 (VMEM resident)
                pl.BlockSpec(memory_space=pltpu.MemorySpace.SMEM),   # b2 scalar
            ],
            out_specs=pl.BlockSpec((1, 1, TT), lambda b, t: (b, 0, t)),
        ),
        compiler_params=pltpu.CompilerParams(
            dimension_semantics=("parallel", "parallel"),
        ),
        cost_estimate=pl.CostEstimate(
            flops=flops, transcendentals=0, bytes_accessed=bytes_accessed),
    )(x, w1, b1_col, w2, b2_s)

    # (B, 1, T) -> (B, T, 1); moving the size-1 axis is layout-free.
    return out[:, 0, :, None]


def init_params():
    """Deterministic parameter init (shapes from clf_net.__init__)."""
    k1, k2, k3, k4 = jax.random.split(jax.random.PRNGKey(42), 4)
    # PyTorch Linear stores weight as (out_features, in_features); the kernel
    # uses that layout directly (it computes W @ x_t in transposed orientation).
    w1 = jax.random.normal(k1, (128, 64), dtype=jnp.float32) * 0.05
    b1 = jax.random.normal(k2, (128,), dtype=jnp.float32) * 0.05
    w2 = jax.random.normal(k3, (1, 128), dtype=jnp.float32) * 0.05
    b2 = jax.random.normal(k4, (1,), dtype=jnp.float32) * 0.05
    return w1, b1, w2, b2


def reference_forward(x, w1, b1, w2, b2):
    """Pure-JAX reference mirroring the PyTorch forward (weights in (out, in))."""
    out = jnp.maximum(x, 0.0)
    out = jnp.transpose(out, (0, 2, 1))          # (B, T, 64)
    out = out @ w1.T + b1                        # (B, T, 128)
    out = jnp.maximum(out, 0.0)
    out = out @ w2.T + b2                        # (B, T, 1)
    return out


if __name__ == "__main__":
    # TODO(synk): maxpool/flatten are defined in clf_net.__init__ but never used
    # in forward(), so they are intentionally not implemented.
    B, C, T = 2, 64, 8
    key = jax.random.PRNGKey(0)
    x = jax.random.normal(key, (B, C, T), dtype=jnp.float32)

    w1, b1, w2, b2 = init_params()

    out = clf_net_forward(x, w1, b1, w2, b2)
    out = jax.block_until_ready(out)

    ref = reference_forward(x, w1, b1, w2, b2)
    assert out.shape == (B, T, 1)
    assert jnp.allclose(out, ref, atol=1e-5, rtol=1e-5)

    print("KERNEL_OK")
</pallas_src>

<mosaic_0001>
module attributes {stable_mosaic.version = 11 : i64} {
  func.func @clf_kernel(%arg0: i32, %arg1: i32, %arg2: memref<1x64x8xf32, #tpu.memory_space<vmem>>, %arg3: memref<128x64xf32, #tpu.memory_space<vmem>>, %arg4: memref<128x1xf32, #tpu.memory_space<vmem>>, %arg5: memref<1x128xf32, #tpu.memory_space<vmem>>, %arg6: memref<1xf32, #tpu.memory_space<smem>>, %arg7: memref<1x1x8xf32, #tpu.memory_space<vmem>>) attributes {dimension_semantics = [#tpu.dimension_semantics<parallel>, #tpu.dimension_semantics<parallel>], iteration_bounds = array<i64: 2, 1>, scalar_prefetch = 0 : i64, scratch_operands = 0 : i64, tpu.core_type = #tpu.core_type<tc>, window_params = [{transform_indices = @transform_0, window_bounds = array<i64: 1, 64, 8>}, {pipeline_mode = #tpu.pipeline_mode<synchronous>, transform_indices = @transform_1, window_bounds = array<i64: 128, 64>}, {pipeline_mode = #tpu.pipeline_mode<synchronous>, transform_indices = @transform_2, window_bounds = array<i64: 128, 1>}, {pipeline_mode = #tpu.pipeline_mode<synchronous>, transform_indices = @transform_3, window_bounds = array<i64: 1, 128>}, {transform_indices = @transform_4, window_bounds = array<i64: 1>}, {transform_indices = @transform_5, window_bounds = array<i64: 1, 1, 8>}]} {
    %c0 = arith.constant 0 : index
    %c0_0 = arith.constant 0 : index
    %c0_1 = arith.constant 0 : index
    %0 = vector.load %arg2[%c0, %c0_0, %c0_1] : memref<1x64x8xf32, #tpu.memory_space<vmem>>, vector<1x64x8xf32>
    %1 = vector.shape_cast %0 : vector<1x64x8xf32> to vector<64x8xf32>
    %cst = arith.constant 0.000000e+00 : f32
    %2 = vector.broadcast %cst : f32 to vector<64x8xf32>
    %3 = arith.maximumf %1, %2 : vector<64x8xf32>
    %c0_2 = arith.constant 0 : index
    %c0_3 = arith.constant 0 : index
    %4 = vector.load %arg3[%c0_2, %c0_3] : memref<128x64xf32, #tpu.memory_space<vmem>>, vector<128x64xf32>
    %cst_4 = arith.constant dense<0.000000e+00> : vector<128x8xf32>
    %5 = tpu.matmul %4, %3, %cst_4 {dimension_numbers = #tpu.dot_dimension_numbers<[1], [0], [0], [1], [0, 0, 1, 1], [], []>} : vector<128x64xf32>, vector<64x8xf32>, vector<128x8xf32> -> vector<128x8xf32>
    %c0_5 = arith.constant 0 : index
    %c0_6 = arith.constant 0 : index
    %6 = vector.load %arg4[%c0_5, %c0_6] : memref<128x1xf32, #tpu.memory_space<vmem>>, vector<128x1xf32>
    %7 = vector.broadcast %6 : vector<128x1xf32> to vector<128x8xf32>
    %8 = arith.addf %5, %7 : vector<128x8xf32>
    %cst_7 = arith.constant 0.000000e+00 : f32
    %9 = vector.broadcast %cst_7 : f32 to vector<128x8xf32>
    %10 = arith.maximumf %8, %9 : vector<128x8xf32>
    %c0_8 = arith.constant 0 : index
    %c0_9 = arith.constant 0 : index
    %11 = vector.load %arg5[%c0_8, %c0_9] : memref<1x128xf32, #tpu.memory_space<vmem>>, vector<1x128xf32>
    %cst_10 = arith.constant dense<0.000000e+00> : vector<1x8xf32>
    %12 = tpu.matmul %11, %10, %cst_10 {dimension_numbers = #tpu.dot_dimension_numbers<[1], [0], [0], [1], [0, 0, 1, 1], [], []>} : vector<1x128xf32>, vector<128x8xf32>, vector<1x8xf32> -> vector<1x8xf32>
    %c0_11 = arith.constant 0 : index
    %13 = memref.load %arg6[%c0_11] : memref<1xf32, #tpu.memory_space<smem>>
    %14 = vector.broadcast %13 : f32 to vector<1x8xf32>
    %15 = arith.addf %12, %14 : vector<1x8xf32>
    %c0_12 = arith.constant 0 : index
    %c0_13 = arith.constant 0 : index
    %c0_14 = arith.constant 0 : index
    %16 = vector.load %arg7[%c0_12, %c0_13, %c0_14] : memref<1x1x8xf32, #tpu.memory_space<vmem>>, vector<1x1x8xf32>
    %17 = vector.shape_cast %16 : vector<1x1x8xf32> to vector<1x8xf32>
    %18 = vector.shape_cast %15 : vector<1x8xf32> to vector<1x1x8xf32>
    tpu.vector_store %arg7[%c0_12, %c0_13, %c0_14], %18 {strides = array<i32>} : memref<1x1x8xf32, #tpu.memory_space<vmem>>, vector<1x1x8xf32>,
    return
  }
  func.func @transform_0(%arg0: i32, %arg1: i32) -> (i32, i32, i32) {
    %c0_i32 = arith.constant 0 : i32
    %c0_i32_0 = arith.constant 0 : i32
    return %arg0, %c0_i32, %arg1 : i32, i32, i32
  }
  func.func @transform_1(%arg0: i32, %arg1: i32) -> (i32, i32) {
    %c0_i32 = arith.constant 0 : i32
    %c0_i32_0 = arith.constant 0 : i32
    %c0_i32_1 = arith.constant 0 : i32
    return %c0_i32, %c0_i32_0 : i32, i32
  }
  func.func @transform_2(%arg0: i32, %arg1: i32) -> (i32, i32) {
    %c0_i32 = arith.constant 0 : i32
    %c0_i32_0 = arith.constant 0 : i32
    %c0_i32_1 = arith.constant 0 : i32
    return %c0_i32, %c0_i32_0 : i32, i32
  }
  func.func @transform_3(%arg0: i32, %arg1: i32) -> (i32, i32) {
    %c0_i32 = arith.constant 0 : i32
    %c0_i32_0 = arith.constant 0 : i32
    %c0_i32_1 = arith.constant 0 : i32
    return %c0_i32, %c0_i32_0 : i32, i32
  }
  func.func @transform_4(%arg0: i32, %arg1: i32) -> i32 {
    %c0_i32 = arith.constant 0 : i32
    %c0_i32_0 = arith.constant 0 : i32
    return %c0_i32 : i32
  }
  func.func @transform_5(%arg0: i32, %arg1: i32) -> (i32, i32, i32) {
    %c0_i32 = arith.constant 0 : i32
    %c0_i32_0 = arith.constant 0 : i32
    return %arg0, %c0_i32, %arg1 : i32, i32, i32
  }
}

</mosaic_0001>

<llo_original>
// kernel: clf_net_forward.1
$region0: #{clf_net_forward.1}
  #allocation0 [shape = 'u32[]', space=smem, size = 0x4, offset = 0x4, fixed_abs, tag = 'smem constant byte address 0x4 - core index']
  #allocation1 [shape = 'u32[144,128]{1,0:T(1,128)}', space=vmem, size = 0x12000, scoped, tag = 'internal scratch']
  #allocation2 [shape = 'f32[1]{0:T(128)S(6)}', space=smem, size = 0x200, scoped, tag = 'scoped memory for clf_net_forward.1']
  %s0 = inlined_call_operand.vmem [shape: f32[2,64,8], index: 0, kind: input, shape index: {}]
  %s1 = inlined_call_operand.vmem [shape: f32[128,64], index: 1, kind: input, shape index: {}]
  %s2 = inlined_call_operand.vmem [shape: f32[128,1], index: 2, kind: input, shape index: {}]
  %s3 = inlined_call_operand.vmem [shape: f32[1,128], index: 3, kind: input, shape index: {}]
  %s4 = inlined_call_operand.<no memory space> [shape: f32[1], index: 4, kind: input, shape index: {}]
  %s5 = inlined_call_operand.hbm [shape: f32[2,1,8], index: 5, kind: output, shape index: {}]
  %s6 = sld [smem:[#allocation0]]
  $region53: #{clf_net_forward.1} parent=0
    _
  %s8 = ssub.s32 1, %s6
  %s9 = scalar_select 0, %s8, %s6
  %10 = sst [smem:[#allocation2]] %s4
  $region1: #{clf_net_forward.1} parent=0
    #allocation3 [shape = 'u8[1024]{0}', space=vmem, size = 0x400, scoped, tag = 'output window, operand 0']
    #allocation4 [shape = 's32[2]{0}', space=sflag, size = 0x8, scoped, tag = 'scoped memory for clf_net_forward.1']
    %11 = vsyncpa [#allocation4], 0
    %s12 = scalar_lea.sflag [#allocation4], 1
    %13 = vsyncpa %s12, 0
    loop: start=0, step=1, limit=4
    $region2: #{clf_net_forward.1} parent=1 // loop_pre_header
      _
    $region3: #{clf_net_forward.1} parent=1 // loop_header
      %s15 = sphi 0, %s19
      %p16 = scmp.ge.s32.totalorder %s15, 4
      %s22 = sphi 0, %s34
      %s23 = sphi 0, %s30
      %s24 = sphi 0, %s22
      %s25 = sphi 0, %s23
      %s26 = sphi 0, %s24
      %s27 = sphi 0, %s25
      %s39 = sphi 0, %s41
      %s42 = sphi 0, %s39
      %s43 = sphi 0, %s42
      %s59 = sphi 0, %s43
      %s63 = sphi 0, %s63
      %s65 = sphi 0, %s63
      %s66 = sphi 0, %s65
      %s80 = sphi 0, %s66
      %s84 = sphi 0, %s84
      %s86 = sphi 0, %s84
      %s87 = sphi 0, %s86
      %s101 = sphi 0, %s87
      %s105 = sphi 0, %s105
      %s107 = sphi 0, %s105
      %s108 = sphi 0, %s107
      %s122 = sphi 0, %s108
      %s126 = sphi 0, %s126
      %s128 = sphi 0, %s126
      %s129 = sphi 0, %s128
      %s143 = sphi 0, %s129
      %s151 = sphi 0, %s153
      %s154 = sphi 0, %s151
      %s155 = sphi 0, %s154
      %s171 = sphi 0, %s155
    $region4: #{clf_net_forward.1} parent=1 // loop_header_branch
      %18 = sbr.rel (%p16) target = $region8
    $region5: #{clf_net_forward.1} parent=1 // loop_body
      %s20 = ssub.s32 %s15, 1
      %s21 = ssub.s32 %s15, 2
      %s28 = sadd.s32 1, %s23
      %p29 = scmp.ge.s32.totalorder %s28, 1
      %s30 = scalar_select %p29, 0, %s28
      %s31 = sadd.s32 1, %s22
      %s32 = scalar_select %p29, %s31, %s22
      %p33 = scmp.ge.s32.totalorder %s32, 2
      %s34 = scalar_select %p33, 0, %s32
      %s35 = ssub.s32 %s22, %s34
      %s36 = ssub.s32 %s23, %s30
      %s37 = sor.u32 %s35, %s36
      %p38 = scmp.eq.s32.totalorder %s37, 0
      %s40 = sadd.s32 %s39, 1
      %s41 = scalar_select %p38, %s39, %s40
      %p44 = pneg %p38
      %p45 = scmp.eq.s32.totalorder %s15, 1
      %p46 = por %p44, %p45
      %p47 = scmp.ne.s32.totalorder %s39, %s42
      %p48 = scmp.eq.s32.totalorder %s15, 0
      %p49 = por %p47, %p48
      %p50 = scmp.ne.s32.totalorder %s39, %s42
      %p51 = scmp.eq.s32.totalorder %s20, 1
      %p52 = por %p50, %p51
      %p53 = scmp.ne.s32.totalorder %s42, %s43
      %p54 = scmp.eq.s32.totalorder %s20, 0
      %p55 = por %p53, %p54
      %p56 = scmp.ne.s32.totalorder %s42, %s43
      %p57 = scmp.eq.s32.totalorder %s21, 1
      %p58 = por %p56, %p57
      %p60 = scmp.ne.s32.totalorder %s43, %s59
      %p61 = scmp.eq.s32.totalorder %s21, 0
      %p62 = por %p60, %p61
      %s64 = sadd.s32 %s63, 1
      %p67 = scmp.eq.s32.totalorder %s15, 1
      %p68 = scmp.ne.s32.totalorder %s63, %s65
      %p69 = scmp.eq.s32.totalorder %s15, 0
      %p70 = por %p68, %p69
      %p71 = scmp.ne.s32.totalorder %s63, %s65
      %p72 = scmp.eq.s32.totalorder %s20, 1
      %p73 = por %p71, %p72
      %p74 = scmp.ne.s32.totalorder %s65, %s66
      %p75 = scmp.eq.s32.totalorder %s20, 0
      %p76 = por %p74, %p75
      %p77 = scmp.ne.s32.totalorder %s65, %s66
      %p78 = scmp.eq.s32.totalorder %s21, 1
      %p79 = por %p77, %p78
      %p81 = scmp.ne.s32.totalorder %s66, %s80
      %p82 = scmp.eq.s32.totalorder %s21, 0
      %p83 = por %p81, %p82
      %s85 = sadd.s32 %s84, 1
      %p88 = scmp.eq.s32.totalorder %s15, 1
      %p89 = scmp.ne.s32.totalorder %s84, %s86
      %p90 = scmp.eq.s32.totalorder %s15, 0
      %p91 = por %p89, %p90
      %p92 = scmp.ne.s32.totalorder %s84, %s86
      %p93 = scmp.eq.s32.totalorder %s20, 1
      %p94 = por %p92, %p93
      %p95 = scmp.ne.s32.totalorder %s86, %s87
      %p96 = scmp.eq.s32.totalorder %s20, 0
      %p97 = por %p95, %p96
      %p98 = scmp.ne.s32.totalorder %s86, %s87
      %p99 = scmp.eq.s32.totalorder %s21, 1
      %p100 = por %p98, %p99
      %p102 = scmp.ne.s32.totalorder %s87, %s101
      %p103 = scmp.eq.s32.totalorder %s21, 0
      %p104 = por %p102, %p103
      %s106 = sadd.s32 %s105, 1
      %p109 = scmp.eq.s32.totalorder %s15, 1
      %p110 = scmp.ne.s32.totalorder %s105, %s107
      %p111 = scmp.eq.s32.totalorder %s15, 0
      %p112 = por %p110, %p111
      %p113 = scmp.ne.s32.totalorder %s105, %s107
      %p114 = scmp.eq.s32.totalorder %s20, 1
      %p115 = por %p113, %p114
      %p116 = scmp.ne.s32.totalorder %s107, %s108
      %p117 = scmp.eq.s32.totalorder %s20, 0
      %p118 = por %p116, %p117
      %p119 = scmp.ne.s32.totalorder %s107, %s108
      %p120 = scmp.eq.s32.totalorder %s21, 1
      %p121 = por %p119, %p120
      %p123 = scmp.ne.s32.totalorder %s108, %s122
      %p124 = scmp.eq.s32.totalorder %s21, 0
      %p125 = por %p123, %p124
      %s127 = sadd.s32 %s126, 1
      %p130 = scmp.eq.s32.totalorder %s15, 1
      %p131 = scmp.ne.s32.totalorder %s126, %s128
      %p132 = scmp.eq.s32.totalorder %s15, 0
      %p133 = por %p131, %p132
      %p134 = scmp.ne.s32.totalorder %s126, %s128
      %p135 = scmp.eq.s32.totalorder %s20, 1
      %p136 = por %p134, %p135
      %p137 = scmp.ne.s32.totalorder %s128, %s129
      %p138 = scmp.eq.s32.totalorder %s20, 0
      %p139 = por %p137, %p138
      %p140 = scmp.ne.s32.totalorder %s128, %s129
      %p141 = scmp.eq.s32.totalorder %s21, 1
      %p142 = por %p140, %p141
      %p144 = scmp.ne.s32.totalorder %s129, %s143
      %p145 = scmp.eq.s32.totalorder %s21, 0
      %p146 = por %p144, %p145
      %s147 = ssub.s32 %s22, %s34
      %s148 = ssub.s32 %s23, %s30
      %s149 = sor.u32 %s147, %s148
      %p150 = scmp.eq.s32.totalorder %s149, 0
      %s152 = sadd.s32 %s151, 1
      %s153 = scalar_select %p150, %s151, %s152
      %p156 = pneg %p150
      %p157 = scmp.eq.s32.totalorder %s15, 1
      %p158 = por %p156, %p157
      %p159 = scmp.ne.s32.totalorder %s151, %s154
      %p160 = scmp.eq.s32.totalorder %s15, 0
      %p161 = por %p159, %p160
      %p162 = scmp.ne.s32.totalorder %s151, %s154
      %p163 = scmp.eq.s32.totalorder %s20, 1
      %p164 = por %p162, %p163
      %p165 = scmp.ne.s32.totalorder %s154, %s155
      %p166 = scmp.eq.s32.totalorder %s20, 0
      %p167 = por %p165, %p166
      %p168 = scmp.ne.s32.totalorder %s154, %s155
      %p169 = scmp.eq.s32.totalorder %s21, 1
      %p170 = por %p168, %p169
      %p172 = scmp.ne.s32.totalorder %s155, %s171
      %p173 = scmp.eq.s32.totalorder %s21, 0
      %p174 = por %p172, %p173
      %p175 = scmp.le.s32.totalorder 1, %s15
      %p176 = scmp.lt.s32.totalorder %s15, 3
      %p177 = pnand %p175, %p176
      %p178 = pneg %p177
      // Predicated region
      $region9: #{clf_net_forward.1} parent=5 // pred_check
        _
      $region10: #{clf_net_forward.1} parent=5 // pred_check_branch
        %180 = sbr.rel (%p177) target = $region12
      $region11: #{clf_net_forward.1} parent=5 // pred_region
        %s181 = ssub.s32 %s15, 1
        // Predicated region
        $region13: #{clf_net_forward.1} parent=11 // pred_check
          %p182 = pneg %p76
        $region14: #{clf_net_forward.1} parent=11 // pred_check_branch
          %184 = sbr.rel (%p182) target = $region16
        $region15: #{clf_net_forward.1} parent=11 // pred_region
          _
        $region16: #{clf_net_forward.1} parent=11 // pred_fallthru
          _
        // Predicated region
        $region17: #{clf_net_forward.1} parent=11 // pred_check
          %p185 = pneg %p97
        $region18: #{clf_net_forward.1} parent=11 // pred_check_branch
          %187 = sbr.rel (%p185) target = $region20
        $region19: #{clf_net_forward.1} parent=11 // pred_region
          _
        $region20: #{clf_net_forward.1} parent=11 // pred_fallthru
          _
        // Predicated region
        $region21: #{clf_net_forward.1} parent=11 // pred_check
          %p188 = pneg %p118
        $region22: #{clf_net_forward.1} parent=11 // pred_check_branch
          %190 = sbr.rel (%p188) target = $region24
        $region23: #{clf_net_forward.1} parent=11 // pred_region
          _
        $region24: #{clf_net_forward.1} parent=11 // pred_fallthru
          _
        // Predicated region
        $region25: #{clf_net_forward.1} parent=11 // pred_check
          %p191 = pneg %p139
        $region26: #{clf_net_forward.1} parent=11 // pred_check_branch
          %193 = sbr.rel (%p191) target = $region28
        $region27: #{clf_net_forward.1} parent=11 // pred_region
          _
        $region28: #{clf_net_forward.1} parent=11 // pred_fallthru
          _
      $region12: #{clf_net_forward.1} parent=5 // pred_fallthru
        _
      %p194 = scmp.lt.s32.totalorder %s15, 2
      // Predicated region
      $region29: #{clf_net_forward.1} parent=5 // pred_check
        %p195 = pneg %p194
      $region30: #{clf_net_forward.1} parent=5 // pred_check_branch
        %197 = sbr.rel (%p195) target = $region32
      $region31: #{clf_net_forward.1} parent=5 // pred_region
        // Predicated region
        $region33: #{clf_net_forward.1} parent=31 // pred_check
          %p198 = pneg %p49
        $region34: #{clf_net_forward.1} parent=31 // pred_check_branch
          %200 = sbr.rel (%p198) target = $region36
        $region35: #{clf_net_forward.1} parent=31 // pred_region
          %p201 = scmp.lt.s32.totalorder %s22, 1
          %s202 = scalar_select %p201, %s22, 1
          %p203 = scmp.lt.s32.totalorder %s23, 0
          %s204 = scalar_select %p203, %s23, 0
          %s205 = smul.addr %s202, 8
          %s206 = sadd.s32 %s204, %s205
          %s207 = smul.addr %s206, 8
          %s208 = scalar_lea.vmem %s0, %s207
        $region36: #{clf_net_forward.1} parent=31 // pred_fallthru
          _
      $region32: #{clf_net_forward.1} parent=5 // pred_fallthru
        _
      %p209 = scmp.le.s32.totalorder 1, %s15
      %p210 = scmp.lt.s32.totalorder %s15, 3
      %p211 = pnand %p209, %p210
      %p212 = pneg %p211
      // Predicated region
      $region37: #{clf_net_forward.1} parent=5 // pred_check
        _
      $region38: #{clf_net_forward.1} parent=5 // pred_check_branch
        %214 = sbr.rel (%p211) target = $region40
      $region39: #{clf_net_forward.1} parent=5 // pred_region
        %s215 = ssub.s32 %s15, 1
        %p216 = scmp.lt.s32.totalorder %s24, 1
        %s217 = scalar_select %p216, %s24, 1
        %p218 = scmp.lt.s32.totalorder %s25, 0
        %s219 = scalar_select %p218, %s25, 0
        %s220 = smul.addr %s217, 8
        %s221 = sadd.s32 %s219, %s220
        %s222 = smul.addr %s221, 8
        %s223 = scalar_lea.vmem %s0, %s222
        %p224 = pneg %p55
        %p225 = pneg %p52
        %p226 = pneg %p76
        %p227 = pneg %p73
        %p228 = pneg %p97
        %p229 = pneg %p94
        %p230 = pneg %p118
        %p231 = pneg %p115
        %p232 = pneg %p139
        %p233 = pneg %p136
        %p234 = pneg %p167
        %p235 = pneg %p164
        %s236 = sand.u32 %s154, 1
        %s237 = scalar_lea.sflag [#allocation4], %s236
        %s238 = sand.u32 %s154, 1
        %s239 = scalar_lea.vmem [#allocation3], %s238
        %p240 = scmp.lt.s32.totalorder %s24, 1
        %s241 = scalar_select %p240, %s24, 1
        %p242 = scmp.lt.s32.totalorder %s25, 0
        %s243 = scalar_select %p242, %s25, 0
        %s244 = smul.addr %s241, 8
        %s245 = sadd.s32 %s243, %s244
        %s246 = smul.addr %s245, 8
        %s247 = scalar_lea.vmem %s0, %s246
        %v248 = vld [vmem:[%s247] sm:$0xff]
        %v249 = vld [vmem:[%s247 + $0x8] sm:$0xff]
        %v250 = vld [vmem:[%s247 + $0x10] sm:$0xff]
        %v251 = vld [vmem:[%s247 + $0x18] sm:$0xff]
        %v252 = vld [vmem:[%s247 + $0x20] sm:$0xff]
        %v253 = vld [vmem:[%s247 + $0x28] sm:$0xff]
        %v254 = vld [vmem:[%s247 + $0x30] sm:$0xff]
        %v255 = vld [vmem:[%s247 + $0x38] sm:$0xff]
        %v256 = vmax.f32 %v248, 0.0
        %v257 = vmax.f32 %v249, 0.0
        %v258 = vmax.f32 %v250, 0.0
        %v259 = vmax.f32 %v251, 0.0
        %v260 = vmax.f32 %v252, 0.0
        %v261 = vmax.f32 %v253, 0.0
        %v262 = vmax.f32 %v254, 0.0
        %v263 = vmax.f32 %v255, 0.0
        %v264 = vld [vmem:[%s1] sm:$0xff]
        %v265 = vld [vmem:[%s1 + $0x8] sm:$0xff]
        %v266 = vld [vmem:[%s1 + $0x10] sm:$0xff]
        %v267 = vld [vmem:[%s1 + $0x18] sm:$0xff]
        %v268 = vld [vmem:[%s1 + $0x20] sm:$0xff]
        %v269 = vld [vmem:[%s1 + $0x28] sm:$0xff]
        %v270 = vld [vmem:[%s1 + $0x30] sm:$0xff]
        %v271 = vld [vmem:[%s1 + $0x38] sm:$0xff]
        %v272 = vld [vmem:[%s1 + $0x40] sm:$0xff]
        %v273 = vld [vmem:[%s1 + $0x48] sm:$0xff]
        %v274 = vld [vmem:[%s1 + $0x50] sm:$0xff]
        %v275 = vld [vmem:[%s1 + $0x58] sm:$0xff]
        %v276 = vld [vmem:[%s1 + $0x60] sm:$0xff]
        %v277 = vld [vmem:[%s1 + $0x68] sm:$0xff]
        %v278 = vld [vmem:[%s1 + $0x70] sm:$0xff]
        %v279 = vld [vmem:[%s1 + $0x78] sm:$0xff]
        %v280 = vld [vmem:[%s2] sm:$0xff]
        %v281 = vld [vmem:[%s2 + $0x8] sm:$0xff]
        %v282 = vld [vmem:[%s2 + $0x10] sm:$0xff]
        %v283 = vld [vmem:[%s2 + $0x18] sm:$0xff]
        %v284 = vld [vmem:[%s2 + $0x20] sm:$0xff]
        %v285 = vld [vmem:[%s2 + $0x28] sm:$0xff]
        %v286 = vld [vmem:[%s2 + $0x30] sm:$0xff]
        %v287 = vld [vmem:[%s2 + $0x38] sm:$0xff]
        %v288 = vld [vmem:[%s2 + $0x40] sm:$0xff]
        %v289 = vld [vmem:[%s2 + $0x48] sm:$0xff]
        %v290 = vld [vmem:[%s2 + $0x50] sm:$0xff]
        %v291 = vld [vmem:[%s2 + $0x58] sm:$0xff]
        %v292 = vld [vmem:[%s2 + $0x60] sm:$0xff]
        %v293 = vld [vmem:[%s2 + $0x68] sm:$0xff]
        %v294 = vld [vmem:[%s2 + $0x70] sm:$0xff]
        %v295 = vld [vmem:[%s2 + $0x78] sm:$0xff]
        %297 = vset.pattern.permute.xlu0 0
        %298 = vperm.xlu0 %297, %v280
        %v299 = vpop.permute.xlu0 %298
        %302 = vset.pattern.permute.xlu0 0
        %303 = vperm.xlu0 %302, %v281
        %v304 = vpop.permute.xlu0 %303
        %307 = vset.pattern.permute.xlu0 0
        %308 = vperm.xlu0 %307, %v282
        %v309 = vpop.permute.xlu0 %308
        %312 = vset.pattern.permute.xlu0 0
        %313 = vperm.xlu0 %312, %v283
        %v314 = vpop.permute.xlu0 %313
        %317 = vset.pattern.permute.xlu0 0
        %318 = vperm.xlu0 %317, %v284
        %v319 = vpop.permute.xlu0 %318
        %322 = vset.pattern.permute.xlu0 0
        %323 = vperm.xlu0 %322, %v285
        %v324 = vpop.permute.xlu0 %323
        %327 = vset.pattern.permute.xlu0 0
        %328 = vperm.xlu0 %327, %v286
        %v329 = vpop.permute.xlu0 %328
        %332 = vset.pattern.permute.xlu0 0
        %333 = vperm.xlu0 %332, %v287
        %v334 = vpop.permute.xlu0 %333
        %337 = vset.pattern.permute.xlu0 0
        %338 = vperm.xlu0 %337, %v288
        %v339 = vpop.permute.xlu0 %338
        %342 = vset.pattern.permute.xlu0 0
        %343 = vperm.xlu0 %342, %v289
        %v344 = vpop.permute.xlu0 %343
        %347 = vset.pattern.permute.xlu0 0
        %348 = vperm.xlu0 %347, %v290
        %v349 = vpop.permute.xlu0 %348
        %352 = vset.pattern.permute.xlu0 0
        %353 = vperm.xlu0 %352, %v291
        %v354 = vpop.permute.xlu0 %353
        %357 = vset.pattern.permute.xlu0 0
        %358 = vperm.xlu0 %357, %v292
        %v359 = vpop.permute.xlu0 %358
        %362 = vset.pattern.permute.xlu0 0
        %363 = vperm.xlu0 %362, %v293
        %v364 = vpop.permute.xlu0 %363
        %367 = vset.pattern.permute.xlu0 0
        %368 = vperm.xlu0 %367, %v294
        %v369 = vpop.permute.xlu0 %368
        %372 = vset.pattern.permute.xlu0 0
        %373 = vperm.xlu0 %372, %v295
        %v374 = vpop.permute.xlu0 %373
        %vm376 = vcmask 523264
        %v378 = vsel %vm376, %v264, 0
        %v381 = vsel %vm376, %v265, 0
        %v384 = vsel %vm376, %v266, 0
        %v387 = vsel %vm376, %v267, 0
        %v390 = vsel %vm376, %v268, 0
        %v393 = vsel %vm376, %v269, 0
        %v396 = vsel %vm376, %v270, 0
        %v399 = vsel %vm376, %v271, 0
        %v402 = vsel %vm376, %v272, 0
        %v405 = vsel %vm376, %v273, 0
        %v408 = vsel %vm376, %v274, 0
        %v411 = vsel %vm376, %v275, 0
        %v414 = vsel %vm376, %v276, 0
        %v417 = vsel %vm376, %v277, 0
        %v420 = vsel %vm376, %v278, 0
        %v423 = vsel %vm376, %v279, 0
        %425 = vmatprep.subr.mxu0 0.0
        %426 = vmatpush1.msra.mxu0 %v256
        %427 = vmatprep.subr.mxu0 0.0
        %428 = vmatpush1.msra.mxu0 %v257
        %429 = vmatprep.subr.mxu0 0.0
        %430 = vmatpush1.msra.mxu0 %v258
        %431 = vmatprep.subr.mxu0 0.0
        %432 = vmatpush1.msra.mxu0 %v259
        %433 = vmatprep.subr.mxu0 0.0
        %434 = vmatpush1.msra.mxu0 %v260
        %435 = vmatprep.subr.mxu0 0.0
        %436 = vmatpush1.msra.mxu0 %v261
        %437 = vmatprep.subr.mxu0 0.0
        %438 = vmatpush1.msra.mxu0 %v262
        %439 = vmatprep.subr.mxu0 0.0
        %440 = vmatpush1.msra.mxu0 %v263
        %441 = vmatprep.subr.mxu0 0.0
        %442 = vmatpush1.msra.mxu0 0.0
        %443 = vmatprep.subr.mxu0 0.0
        %444 = vmatpush1.msra.mxu0 0.0
        %445 = vmatprep.subr.mxu0 0.0
        %446 = vmatpush1.msra.mxu0 0.0
        %447 = vmatprep.subr.mxu0 0.0
        %448 = vmatpush1.msra.mxu0 0.0
        %449 = vmatprep.subr.mxu0 0.0
        %450 = vmatpush1.msra.mxu0 0.0
        %451 = vmatprep.subr.mxu0 0.0
        %452 = vmatpush1.msra.mxu0 0.0
        %453 = vmatprep.subr.mxu0 0.0
        %454 = vmatpush1.msra.mxu0 0.0
        %455 = vmatprep.subr.mxu0 0.0
        %456 = vmatpush1.msra.mxu0 0.0
        %457 = vmatprep.subr.mxu0 0.0
        %458 = vmatpush1.msra.mxu0 0.0
        %459 = vmatprep.subr.mxu0 0.0
        %460 = vmatpush1.msra.mxu0 0.0
        %461 = vmatprep.subr.mxu0 0.0
        %462 = vmatpush1.msra.mxu0 0.0
        %463 = vmatprep.subr.mxu0 0.0
        %464 = vmatpush1.msra.mxu0 0.0
        %465 = vmatprep.subr.mxu0 0.0
        %466 = vmatpush1.msra.mxu0 0.0
        %467 = vmatprep.subr.mxu0 0.0
        %468 = vmatpush1.msra.mxu0 0.0
        %469 = vmatprep.subr.mxu0 0.0
        %470 = vmatpush1.msra.mxu0 0.0
        %471 = vmatprep.subr.mxu0 0.0
        %472 = vmatpush1.msra.mxu0 0.0
        %473 = vmatprep.subr.mxu0 0.0
        %474 = vmatpush1.msra.mxu0 0.0
        %475 = vmatprep.subr.mxu0 0.0
        %476 = vmatpush1.msra.mxu0 0.0
        %477 = vmatprep.subr.mxu0 0.0
        %478 = vmatpush1.msra.mxu0 0.0
        %479 = vmatprep.subr.mxu0 0.0
        %480 = vmatpush1.msra.mxu0 0.0
        %481 = vmatprep.subr.mxu0 0.0
        %482 = vmatpush1.msra.mxu0 0.0
        %483 = vmatprep.subr.mxu0 0.0
        %484 = vmatpush1.msra.mxu0 0.0
        %485 = vmatprep.subr.mxu0 0.0
        %486 = vmatpush1.msra.mxu0 0.0
        %487 = vmatprep.subr.mxu0 0.0
        %488 = vmatpush1.msra.mxu0 0.0
        %489 = vmatprep.mubr.f32.mxu0 0.0
        %490 = vmatmul.mubr.f32.gmra.mrb[0].mxu0 %v378
        %v491 = vpop.f32.mrb[0].mxu0
        %v492 = vadd.f32 %v299, %v491
        %v493 = vpop.f32.mrb[0].mxu0
        %494 = vmatprep.mubr.f32.mxu0 0.0
        %495 = vmatmul.mubr.f32.gmra.mrb[0].mxu0 %v381
        %v496 = vpop.f32.mrb[0].mxu0
        %v497 = vadd.f32 %v304, %v496
        %v498 = vpop.f32.mrb[0].mxu0
        %499 = vmatprep.mubr.f32.mxu0 0.0
        %500 = vmatmul.mubr.f32.gmra.mrb[0].mxu0 %v384
        %v501 = vpop.f32.mrb[0].mxu0
        %v502 = vadd.f32 %v309, %v501
        %v503 = vpop.f32.mrb[0].mxu0
        %504 = vmatprep.mubr.f32.mxu0 0.0
        %505 = vmatmul.mubr.f32.gmra.mrb[0].mxu0 %v387
        %v506 = vpop.f32.mrb[0].mxu0
        %v507 = vadd.f32 %v314, %v506
        %v508 = vpop.f32.mrb[0].mxu0
        %509 = vmatprep.mubr.f32.mxu0 0.0
        %510 = vmatmul.mubr.f32.gmra.mrb[0].mxu0 %v390
        %v511 = vpop.f32.mrb[0].mxu0
        %v512 = vadd.f32 %v319, %v511
        %v513 = vpop.f32.mrb[0].mxu0
        %514 = vmatprep.mubr.f32.mxu0 0.0
        %515 = vmatmul.mubr.f32.gmra.mrb[0].mxu0 %v393
        %v516 = vpop.f32.mrb[0].mxu0
        %v517 = vadd.f32 %v324, %v516
        %v518 = vpop.f32.mrb[0].mxu0
        %519 = vmatprep.mubr.f32.mxu0 0.0
        %520 = vmatmul.mubr.f32.gmra.mrb[0].mxu0 %v396
        %v521 = vpop.f32.mrb[0].mxu0
        %v522 = vadd.f32 %v329, %v521
        %v523 = vpop.f32.mrb[0].mxu0
        %524 = vmatprep.mubr.f32.mxu0 0.0
        %525 = vmatmul.mubr.f32.gmra.mrb[0].mxu0 %v399
        %v526 = vpop.f32.mrb[0].mxu0
        %v527 = vadd.f32 %v334, %v526
        %v528 = vpop.f32.mrb[0].mxu0
        %529 = vmatprep.mubr.f32.mxu0 0.0
        %530 = vmatmul.mubr.f32.gmra.mrb[0].mxu0 %v402
        %v531 = vpop.f32.mrb[0].mxu0
        %v532 = vadd.f32 %v339, %v531
        %v533 = vpop.f32.mrb[0].mxu0
        %534 = vmatprep.mubr.f32.mxu0 0.0
        %535 = vmatmul.mubr.f32.gmra.mrb[0].mxu0 %v405
        %v536 = vpop.f32.mrb[0].mxu0
        %v537 = vadd.f32 %v344, %v536
        %v538 = vpop.f32.mrb[0].mxu0
        %539 = vmatprep.mubr.f32.mxu0 0.0
        %540 = vmatmul.mubr.f32.gmra.mrb[0].mxu0 %v408
        %v541 = vpop.f32.mrb[0].mxu0
        %v542 = vadd.f32 %v349, %v541
        %v543 = vpop.f32.mrb[0].mxu0
        %544 = vmatprep.mubr.f32.mxu0 0.0
        %545 = vmatmul.mubr.f32.gmra.mrb[0].mxu0 %v411
        %v546 = vpop.f32.mrb[0].mxu0
        %v547 = vadd.f32 %v354, %v546
        %v548 = vpop.f32.mrb[0].mxu0
        %549 = vmatprep.mubr.f32.mxu0 0.0
        %550 = vmatmul.mubr.f32.gmra.mrb[0].mxu0 %v414
        %v551 = vpop.f32.mrb[0].mxu0
        %v552 = vadd.f32 %v359, %v551
        %v553 = vpop.f32.mrb[0].mxu0
        %554 = vmatprep.mubr.f32.mxu0 0.0
        %555 = vmatmul.mubr.f32.gmra.mrb[0].mxu0 %v417
        %v556 = vpop.f32.mrb[0].mxu0
        %v557 = vadd.f32 %v364, %v556
        %v558 = vpop.f32.mrb[0].mxu0
        %559 = vmatprep.mubr.f32.mxu0 0.0
        %560 = vmatmul.mubr.f32.gmra.mrb[0].mxu0 %v420
        %v561 = vpop.f32.mrb[0].mxu0
        %v562 = vadd.f32 %v369, %v561
        %v563 = vpop.f32.mrb[0].mxu0
        %564 = vmatprep.mubr.f32.mxu0 0.0
        %565 = vmatmul.mubr.f32.gmra.mrb[0].mxu0 %v423
        %v566 = vpop.f32.mrb[0].mxu0
        %v567 = vadd.f32 %v374, %v566
        %v568 = vpop.f32.mrb[0].mxu0
        %569 = vdwg.mxu0
        %v570 = vmax.f32 %v492, 0.0
        %v571 = vmax.f32 %v497, 0.0
        %v572 = vmax.f32 %v502, 0.0
        %v573 = vmax.f32 %v507, 0.0
        %v574 = vmax.f32 %v512, 0.0
        %v575 = vmax.f32 %v517, 0.0
        %v576 = vmax.f32 %v522, 0.0
        %v577 = vmax.f32 %v527, 0.0
        %v578 = vmax.f32 %v532, 0.0
        %v579 = vmax.f32 %v537, 0.0
        %v580 = vmax.f32 %v542, 0.0
        %v581 = vmax.f32 %v547, 0.0
        %v582 = vmax.f32 %v552, 0.0
        %v583 = vmax.f32 %v557, 0.0
        %v584 = vmax.f32 %v562, 0.0
        %v585 = vmax.f32 %v567, 0.0
        %v586 = vld [vmem:[%s3] sm:$0x1]
        %s587 = sld [smem:[#allocation2]]
        %v588 = vstv %s587
        %589 = vmatprep.subr.mxu0 0.0
        %590 = vmatpush1.msra.mxu0 %v570
        %591 = vmatprep.subr.mxu0 0.0
        %592 = vmatpush1.msra.mxu0 %v571
        %593 = vmatprep.subr.mxu0 0.0
        %594 = vmatpush1.msra.mxu0 %v572
        %595 = vmatprep.subr.mxu0 0.0
        %596 = vmatpush1.msra.mxu0 %v573
        %597 = vmatprep.subr.mxu0 0.0
        %598 = vmatpush1.msra.mxu0 %v574
        %599 = vmatprep.subr.mxu0 0.0
        %600 = vmatpush1.msra.mxu0 %v575
        %601 = vmatprep.subr.mxu0 0.0
        %602 = vmatpush1.msra.mxu0 %v576
        %603 = vmatprep.subr.mxu0 0.0
        %604 = vmatpush1.msra.mxu0 %v577
        %605 = vmatprep.subr.mxu0 0.0
        %606 = vmatpush1.msra.mxu0 %v578
        %607 = vmatprep.subr.mxu0 0.0
        %608 = vmatpush1.msra.mxu0 %v579
        %609 = vmatprep.subr.mxu0 0.0
        %610 = vmatpush1.msra.mxu0 %v580
        %611 = vmatprep.subr.mxu0 0.0
        %612 = vmatpush1.msra.mxu0 %v581
        %613 = vmatprep.subr.mxu0 0.0
        %614 = vmatpush1.msra.mxu0 %v582
        %615 = vmatprep.subr.mxu0 0.0
        %616 = vmatpush1.msra.mxu0 %v583
        %617 = vmatprep.subr.mxu0 0.0
        %618 = vmatpush1.msra.mxu0 %v584
        %619 = vmatprep.subr.mxu0 0.0
        %620 = vmatpush1.msra.mxu0 %v585
        %621 = vmatprep.subr.mxu0 0.0
        %622 = vmatpush1.msra.mxu0 0.0
        %623 = vmatprep.subr.mxu0 0.0
        %624 = vmatpush1.msra.mxu0 0.0
        %625 = vmatprep.subr.mxu0 0.0
        %626 = vmatpush1.msra.mxu0 0.0
        %627 = vmatprep.subr.mxu0 0.0
        %628 = vmatpush1.msra.mxu0 0.0
        %629 = vmatprep.subr.mxu0 0.0
        %630 = vmatpush1.msra.mxu0 0.0
        %631 = vmatprep.subr.mxu0 0.0
        %632 = vmatpush1.msra.mxu0 0.0
        %633 = vmatprep.subr.mxu0 0.0
        %634 = vmatpush1.msra.mxu0 0.0
        %635 = vmatprep.subr.mxu0 0.0
        %636 = vmatpush1.msra.mxu0 0.0
        %637 = vmatprep.subr.mxu0 0.0
        %638 = vmatpush1.msra.mxu0 0.0
        %639 = vmatprep.subr.mxu0 0.0
        %640 = vmatpush1.msra.mxu0 0.0
        %641 = vmatprep.subr.mxu0 0.0
        %642 = vmatpush1.msra.mxu0 0.0
        %643 = vmatprep.subr.mxu0 0.0
        %644 = vmatpush1.msra.mxu0 0.0
        %645 = vmatprep.subr.mxu0 0.0
        %646 = vmatpush1.msra.mxu0 0.0
        %647 = vmatprep.subr.mxu0 0.0
        %648 = vmatpush1.msra.mxu0 0.0
        %649 = vmatprep.subr.mxu0 0.0
        %650 = vmatpush1.msra.mxu0 0.0
        %651 = vmatprep.subr.mxu0 0.0
        %652 = vmatpush1.msra.mxu0 0.0
        %653 = vmatprep.mubr.f32.mxu0 0.0
        %654 = vmatmul.mubr.f32.gmra.mrb[0].mxu0 %v586
        %v655 = vpop.f32.mrb[0].mxu0
        %v656 = vadd.f32 %v588, %v655
        %v657 = vpop.f32.mrb[0].mxu0
        %658 = vdwg.mxu0
        %vm659 = vcmask 57344
        %660 = vst.msk [vmem:[%s239] sm:$0x1] %vm659, %v656
        %s661 = sand.u32 %s154, 1
        %s662 = scalar_lea.sflag [#allocation4], %s661
        %s663 = sand.u32 %s154, 1
        %s664 = scalar_lea.vmem [#allocation3], %s663
        // Predicated region
        $region41: #{clf_net_forward.1} parent=39 // pred_check
          %p665 = pneg %p164
        $region42: #{clf_net_forward.1} parent=39 // pred_check_branch
          %667 = sbr.rel (%p665) target = $region44
        $region43: #{clf_net_forward.1} parent=39 // pred_region
          %s669 = ssub.s32 16, 16
          %670 = vsyncadd %s662, %s669
          %s671 = sadd.s32 %s25, %s24
          %s672 = smul.addr %s671, 16
          %s673 = scalar_lea.hbm %s5, %s672
          %s675 = sshll.u32 %s664, 4
          %s676 = int_to_ptr.vmem [resolvable:$true] %s675
          %678 = dma.vmem_to_hbm [thread:$0]  %s676, 16, %s673, %s662
        $region44: #{clf_net_forward.1} parent=39 // pred_fallthru
          _
      $region40: #{clf_net_forward.1} parent=5 // pred_fallthru
        _
      %p679 = scmp.le.s32.totalorder 2, %s15
      // Predicated region
      $region45: #{clf_net_forward.1} parent=5 // pred_check
        %p680 = pneg %p679
      $region46: #{clf_net_forward.1} parent=5 // pred_check_branch
        %682 = sbr.rel (%p680) target = $region48
      $region47: #{clf_net_forward.1} parent=5 // pred_region
        %s683 = ssub.s32 %s15, 2
        // Predicated region
        $region49: #{clf_net_forward.1} parent=47 // pred_check
          %p684 = pneg %p170
        $region50: #{clf_net_forward.1} parent=47 // pred_check_branch
          %686 = sbr.rel (%p684) target = $region52
        $region51: #{clf_net_forward.1} parent=47 // pred_region
          %s687 = sand.u32 %s155, 1
          %s688 = scalar_lea.sflag [#allocation4], %s687
          %s689 = sand.u32 %s155, 1
          %s690 = scalar_lea.vmem [#allocation3], %s689
          %691 = dma.done %s688, 16
        $region52: #{clf_net_forward.1} parent=47 // pred_fallthru
          _
      $region48: #{clf_net_forward.1} parent=5 // pred_fallthru
        _
    $region6: #{clf_net_forward.1} parent=1 // loop_footer
      %s19 = sadd.s32 1, %s15
    $region7: #{clf_net_forward.1} parent=1 // loop_footer_branch
      %14 = sbr.rel target = $region3
    $region8: #{clf_net_forward.1} parent=1 // loop_exit
      _
    %692 = vsyncpa [#allocation4], 1
    %s693 = scalar_lea.sflag [#allocation4], 1
    %694 = vsyncpa %s693, 1

</llo_original>
